<compile_context>
chip_gen: v7x
topology: tpu7x:2x2x1
jax: 0.10.0
libtpu: 0.0.40
codegen_flags: <defaults>
</compile_context>

<pallas_src>
import jax
import jax.numpy as jnp
from jax.experimental import pallas as pl
from jax.experimental.pallas import tpu as pltpu


def _round_up(x, m):
    return ((x + m - 1) // m) * m


def _pick_tile(dim, align, cap):
    """Tile length for one array dimension.

    If `dim` is not `align`-aligned, fall back to the full dimension (Pallas'
    full-array-dim exemption from the (8,128) rule).  Otherwise return the
    largest divisor of `dim` that is a multiple of `align` and <= cap, so the
    grid along this axis divides exactly and no zero-padding is ever needed.
    """
    if dim % align != 0:
        return dim
    cap = max(align, min(cap, dim))
    cap -= cap % align
    for c in range(cap, align - 1, -align):
        if dim % c == 0:
            return c
    return align


def _conv1d_kernel(x_ref, w_ref, b_ref, o_ref, acc_ref):
    # x_ref: (tm, tk) compute dtype, w_ref: (tk, tn) compute dtype,
    # b_ref: (1, tn) f32, o_ref: (tm, tn) out dtype,
    # acc_ref: (tm, tn) f32 scratch, resident across the K (last) grid axis.
    k = pl.program_id(2)
    partial = jnp.dot(x_ref[...], w_ref[...], preferred_element_type=jnp.float32)

    @pl.when(k == 0)
    def _():
        acc_ref[...] = partial          # no zero-init + read-modify-write on step 0

    @pl.when(k > 0)
    def _():
        acc_ref[...] += partial

    @pl.when(k == pl.num_programs(2) - 1)
    def _():
        # Bias added exactly once, in f32, in the finalize branch.
        o_ref[...] = (acc_ref[...] + b_ref[...]).astype(o_ref.dtype)


def conv1d(x, weight, bias, *, compute_dtype=jnp.bfloat16,
           tm_cap=512, tn_cap=1024, tk_cap=2048):
    """y = x @ weight + bias, matching HuggingFace Conv1D.forward (torch.addmm).

    x: (..., nx), weight: (nx, nf), bias: (nf,)  ->  (..., nf)
    """
    nx, nf = weight.shape
    orig_shape = x.shape
    x2d = x.reshape(-1, nx)                      # addmm's view(-1, nx)
    M = x2d.shape[0]

    out_dtype = x.dtype
    cbytes = jnp.dtype(compute_dtype).itemsize
    obytes = jnp.dtype(out_dtype).itemsize
    # Sublane packing for the compute dtype: f32 -> 8 rows/vreg, bf16 -> 16, 8-bit -> 32.
    row_align = {4: 8, 2: 16, 1: 32}.get(cbytes, 8)

    # ---- VMEM budget (generation-aware: ~96 MiB v5e/v6e, ~48 MiB v7x) -------
    try:
        vmem_cap = int(pltpu.get_tpu_info().vmem_capacity_bytes)
    except Exception:
        vmem_cap = 64 * 1024 * 1024              # conservative (v7x-sized) fallback
    vmem_budget = int(0.75 * vmem_cap)

    # ---- tile selection ------------------------------------------------------
    tm = min(tm_cap, _round_up(M, row_align))

    def vmem_usage(tk_, tn_):
        # double-buffered x / W / bias input tiles + double-buffered out + f32 acc
        return (2 * (tm * tk_ + tk_ * tn_ + tn_) * cbytes
                + 2 * tm * tn_ * obytes
                + tm * tn_ * 4)

    if vmem_usage(nx, nf) <= int(0.8 * vmem_budget):
        # Weight-resident schedule: the weight block index is constant over the
        # whole grid, so W is DMA'd into VMEM exactly once (not once per M block).
        tk, tn = nx, nf
    else:
        tn = _pick_tile(nf, 128, tn_cap)
        tk = _pick_tile(nx, 128, tk_cap)
        # Shrink toward the budget if needed (stays divisor-aligned).
        while vmem_usage(tk, tn) > vmem_budget:
            new_tk = _pick_tile(nx, 128, max(128, tk // 2)) if tk >= tn else tk
            new_tn = _pick_tile(nf, 128, max(128, tn // 2)) if tn > tk else tn
            if (new_tk, new_tn) == (tk, tn):
                break                             # cannot shrink further
            tk, tn = new_tk, new_tn
        # TODO(synk): if nx is both very large and not 128-aligned, add a
        # one-time K zero-padding fallback instead of the full-dim K tile.

    # Keep both v7x TensorCores busy: if the parallel (M, N) grid would be 1x1
    # for a reasonably large M, split the M axis into two blocks.
    if tm >= M and tn >= nf and M >= 256:
        tm = _round_up(pl.cdiv(M, 2), row_align)

    grid = (pl.cdiv(M, tm), pl.cdiv(nf, tn), pl.cdiv(nx, tk))   # reduction (K) last

    # Operands in compute dtype: bf16 feeds the MXU at full rate and halves the
    # per-tile DMA bytes; bias stays f32 since the accumulate/finalize is f32.
    x_c = x2d.astype(compute_dtype)
    w_c = weight.astype(compute_dtype)
    b_c = bias.astype(jnp.float32).reshape(1, nf)

    cost = pl.CostEstimate(
        flops=2 * M * nx * nf,
        transcendentals=0,
        bytes_accessed=int(nx * nf * cbytes * grid[0]     # W streamed once per M block
                           + M * nx * cbytes * grid[1]    # x streamed once per N block
                           + nf * 4 * grid[0]             # bias per M block
                           + M * nf * obytes),            # output written once
    )

    out = pl.pallas_call(
        _conv1d_kernel,
        out_shape=jax.ShapeDtypeStruct((M, nf), out_dtype),
        grid_spec=pltpu.PrefetchScalarGridSpec(
            num_scalar_prefetch=0,
            grid=grid,
            in_specs=[
                pl.BlockSpec((tm, tk), lambda i, j, k: (i, k)),   # x   (M, K) tile
                pl.BlockSpec((tk, tn), lambda i, j, k: (k, j)),   # W   (K, N) tile
                pl.BlockSpec((1, tn), lambda i, j, k: (0, j)),    # bias (1, N) tile
            ],
            out_specs=pl.BlockSpec((tm, tn), lambda i, j, k: (i, j)),
            scratch_shapes=[pltpu.VMEM((tm, tn), jnp.float32)],
        ),
        compiler_params=pltpu.CompilerParams(
            dimension_semantics=("parallel", "parallel", "arbitrary"),
            vmem_limit_bytes=vmem_budget,
        ),
        cost_estimate=cost,
    )(x_c, w_c, b_c)

    return out.reshape(*orig_shape[:-1], nf)      # view(*size_out)


if __name__ == "__main__":
    # Module config (deterministic, synthetic - mirrors Conv1D(nf, nx) init).
    batch, seq, nx, nf = 2, 8, 32, 64

    key = jax.random.PRNGKey(0)
    kx, kw = jax.random.split(key)

    x = jax.random.normal(kx, (batch, seq, nx), dtype=jnp.float32)
    # nn.init.normal_(w, std=0.02) on torch.empty(nx, nf); bias = zeros(nf)
    weight = 0.02 * jax.random.normal(kw, (nx, nf), dtype=jnp.float32)
    bias = jnp.zeros((nf,), dtype=jnp.float32)

    y = conv1d(x, weight, bias)
    jax.block_until_ready(y)

    # Reference check (plain JAX f32 addmm).  The kernel uses bf16 MXU operands
    # with f32 accumulation, so compare with bf16-appropriate tolerance.
    y_ref = (x.reshape(-1, nx) @ weight + bias).reshape(batch, seq, nf)
    assert y.shape == (batch, seq, nf)
    assert y.dtype == x.dtype
    assert jnp.allclose(y, y_ref, atol=1e-2, rtol=1e-2), float(
        jnp.max(jnp.abs(y - y_ref)))

    print("KERNEL_OK")
</pallas_src>

<mosaic_0001>
module attributes {stable_mosaic.version = 11 : i64} {
  func.func @_conv1d_kernel(%arg0: i32, %arg1: i32, %arg2: i32, %arg3: memref<16x32xbf16, #tpu.memory_space<vmem>>, %arg4: memref<32x64xbf16, #tpu.memory_space<vmem>>, %arg5: memref<1x64xf32, #tpu.memory_space<vmem>>, %arg6: memref<16x64xf32, #tpu.memory_space<vmem>>, %arg7: memref<16x64xf32, #tpu.memory_space<vmem>>) attributes {dimension_semantics = [#tpu.dimension_semantics<parallel>, #tpu.dimension_semantics<parallel>, #tpu.dimension_semantics<arbitrary>], iteration_bounds = array<i64: 1, 1, 1>, scalar_prefetch = 0 : i64, scratch_operands = 1 : i64, tpu.core_type = #tpu.core_type<tc>, window_params = [{transform_indices = @transform_0, window_bounds = array<i64: 16, 32>}, {transform_indices = @transform_1, window_bounds = array<i64: 32, 64>}, {transform_indices = @transform_2, window_bounds = array<i64: 1, 64>}, {transform_indices = @transform_3, window_bounds = array<i64: 16, 64>}]} {
    %c0 = arith.constant 0 : index
    %c0_0 = arith.constant 0 : index
    %0 = vector.load %arg3[%c0, %c0_0] : memref<16x32xbf16, #tpu.memory_space<vmem>>, vector<16x32xbf16>
    %c0_1 = arith.constant 0 : index
    %c0_2 = arith.constant 0 : index
    %1 = vector.load %arg4[%c0_1, %c0_2] : memref<32x64xbf16, #tpu.memory_space<vmem>>, vector<32x64xbf16>
    %cst = arith.constant dense<0.000000e+00> : vector<16x64xf32>
    %2 = tpu.matmul %0, %1, %cst {dimension_numbers = #tpu.dot_dimension_numbers<[1], [0], [0], [1], [0, 0, 1, 1], [], []>} : vector<16x32xbf16>, vector<32x64xbf16>, vector<16x64xf32> -> vector<16x64xf32>
    %c0_i32 = arith.constant 0 : i32
    %3 = arith.cmpi eq, %arg2, %c0_i32 : i32
    %4 = arith.extui %3 : i1 to i32
    %c0_i32_3 = arith.constant 0 : i32
    %5 = arith.cmpi ne, %4, %c0_i32_3 : i32
    scf.if %5 {
      %c0_8 = arith.constant 0 : index
      %c0_9 = arith.constant 0 : index
      %12 = vector.load %arg7[%c0_8, %c0_9] : memref<16x64xf32, #tpu.memory_space<vmem>>, vector<16x64xf32>
      tpu.vector_store %arg7[%c0_8, %c0_9], %2 {strides = array<i32>} : memref<16x64xf32, #tpu.memory_space<vmem>>, vector<16x64xf32>,
    } else {
    }
    %c0_i32_4 = arith.constant 0 : i32
    %6 = arith.cmpi sgt, %arg2, %c0_i32_4 : i32
    %7 = arith.extui %6 : i1 to i32
    %c0_i32_5 = arith.constant 0 : i32
    %8 = arith.cmpi ne, %7, %c0_i32_5 : i32
    scf.if %8 {
      %c0_8 = arith.constant 0 : index
      %c0_9 = arith.constant 0 : index
      %12 = vector.load %arg7[%c0_8, %c0_9] : memref<16x64xf32, #tpu.memory_space<vmem>>, vector<16x64xf32>
      %13 = arith.addf %12, %2 : vector<16x64xf32>
      %c0_10 = arith.constant 0 : index
      %c0_11 = arith.constant 0 : index
      %14 = vector.load %arg7[%c0_10, %c0_11] : memref<16x64xf32, #tpu.memory_space<vmem>>, vector<16x64xf32>
      tpu.vector_store %arg7[%c0_10, %c0_11], %13 {strides = array<i32>} : memref<16x64xf32, #tpu.memory_space<vmem>>, vector<16x64xf32>,
    } else {
    }
    %c0_i32_6 = arith.constant 0 : i32
    %9 = arith.cmpi eq, %arg2, %c0_i32_6 : i32
    %10 = arith.extui %9 : i1 to i32
    %c0_i32_7 = arith.constant 0 : i32
    %11 = arith.cmpi ne, %10, %c0_i32_7 : i32
    scf.if %11 {
      %c0_8 = arith.constant 0 : index
      %c0_9 = arith.constant 0 : index
      %12 = vector.load %arg7[%c0_8, %c0_9] : memref<16x64xf32, #tpu.memory_space<vmem>>, vector<16x64xf32>
      %c0_10 = arith.constant 0 : index
      %c0_11 = arith.constant 0 : index
      %13 = vector.load %arg5[%c0_10, %c0_11] : memref<1x64xf32, #tpu.memory_space<vmem>>, vector<1x64xf32>
      %14 = vector.broadcast %13 : vector<1x64xf32> to vector<16x64xf32>
      %15 = arith.addf %12, %14 : vector<16x64xf32>
      %c0_12 = arith.constant 0 : index
      %c0_13 = arith.constant 0 : index
      %16 = vector.load %arg6[%c0_12, %c0_13] : memref<16x64xf32, #tpu.memory_space<vmem>>, vector<16x64xf32>
      tpu.vector_store %arg6[%c0_12, %c0_13], %15 {strides = array<i32>} : memref<16x64xf32, #tpu.memory_space<vmem>>, vector<16x64xf32>,
    } else {
    }
    return
  }
  func.func @transform_0(%arg0: i32, %arg1: i32, %arg2: i32) -> (i32, i32) {
    %c0_i32 = arith.constant 0 : i32
    return %arg0, %arg2 : i32, i32
  }
  func.func @transform_1(%arg0: i32, %arg1: i32, %arg2: i32) -> (i32, i32) {
    %c0_i32 = arith.constant 0 : i32
    return %arg2, %arg1 : i32, i32
  }
  func.func @transform_2(%arg0: i32, %arg1: i32, %arg2: i32) -> (i32, i32) {
    %c0_i32 = arith.constant 0 : i32
    %c0_i32_0 = arith.constant 0 : i32
    return %c0_i32, %arg1 : i32, i32
  }
  func.func @transform_3(%arg0: i32, %arg1: i32, %arg2: i32) -> (i32, i32) {
    %c0_i32 = arith.constant 0 : i32
    return %arg0, %arg1 : i32, i32
  }
}

</mosaic_0001>

<llo_original>
// kernel: tpu_custom_call.1
$region0: #{tpu_custom_call.1}
  #allocation0 [shape = 'u32[]', space=smem, size = 0x4, offset = 0x4, fixed_abs, tag = 'smem constant byte address 0x4 - core index']
  #allocation1 [shape = 'u32[144,128]{1,0:T(1,128)}', space=vmem, size = 0x12000, scoped, tag = 'internal scratch']
  #allocation2 [shape = 'f32[16,64]{1,0:T(8,128)}', space=vmem, size = 0x2000, scoped, tag = 'scratch operand']
  %s0 = inlined_call_operand.hbm [shape: bf16[16,32], index: 0, kind: input, shape index: {}]
  %s1 = inlined_call_operand.hbm [shape: bf16[32,64], index: 1, kind: input, shape index: {}]
  %s2 = inlined_call_operand.vmem [shape: f32[1,64], index: 2, kind: input, shape index: {}]
  %s3 = inlined_call_operand.hbm [shape: f32[16,64], index: 3, kind: output, shape index: {}]
  %s4 = sld [smem:[#allocation0]]
  $region42: #{tpu_custom_call.1} parent=0
    _
  %s6 = ssub.s32 1, %s4
  %s7 = scalar_select 0, %s6, %s4
  $region1: #{tpu_custom_call.1} parent=0
    #allocation3 [shape = 'u8[4096]{0}', space=vmem, size = 0x1000, scoped, tag = 'input window, operand 0, single buffered']
    #allocation4 [shape = 's32[1]{0}', space=sflag, size = 0x4, scoped, tag = 'scoped memory for tpu_custom_call.1']
    #allocation5 [shape = 's32[1]{0}', space=sflag, size = 0x4, scoped, tag = 'scoped memory for tpu_custom_call.1']
    #allocation6 [shape = 'u8[8192]{0}', space=vmem, size = 0x2000, scoped, tag = 'input window, operand 1, single buffered']
    #allocation7 [shape = 's32[1]{0}', space=sflag, size = 0x4, scoped, tag = 'scoped memory for tpu_custom_call.1']
    #allocation8 [shape = 'u8[8192]{0}', space=vmem, size = 0x2000, scoped, tag = 'output window, operand 0, single buffered']
    %8 = vsyncpa [#allocation4], 0
    %9 = vsyncpa [#allocation7], 0
    %10 = vsyncpa [#allocation5], 0
    // Predicated region
    $region2: #{tpu_custom_call.1} parent=1 // pred_check
      _
    $region3: #{tpu_custom_call.1} parent=1 // pred_check_branch
      %12 = sbr.rel (0) target = $region5
    $region4: #{tpu_custom_call.1} parent=1 // pred_region
      %s14 = ssub.s32 128, 128
      %15 = vsyncadd [#allocation4], %s14
      %s16 = sshll.u32 [#allocation3], 4
      %s17 = int_to_ptr.vmem [resolvable:$true] %s16
      %22 = dma.hbm_to_vmem [thread:$0]  %s0, 128, %s17, [#allocation4], 64, 64, 4
    $region5: #{tpu_custom_call.1} parent=1 // pred_fallthru
      _
    // Predicated region
    $region6: #{tpu_custom_call.1} parent=1 // pred_check
      _
    $region7: #{tpu_custom_call.1} parent=1 // pred_check_branch
      %24 = sbr.rel (0) target = $region9
    $region8: #{tpu_custom_call.1} parent=1 // pred_region
      %s26 = ssub.s32 256, 256
      %27 = vsyncadd [#allocation7], %s26
      %s28 = sshll.u32 [#allocation6], 4
      %s29 = int_to_ptr.vmem [resolvable:$true] %s28
      %34 = dma.hbm_to_vmem [thread:$0]  %s1, 256, %s29, [#allocation7], 64, 64, 4
    $region9: #{tpu_custom_call.1} parent=1 // pred_fallthru
      _
    // Predicated region
    $region10: #{tpu_custom_call.1} parent=1 // pred_check
      _
    $region11: #{tpu_custom_call.1} parent=1 // pred_check_branch
      %36 = sbr.rel (0) target = $region13
    $region12: #{tpu_custom_call.1} parent=1 // pred_region
      _
    $region13: #{tpu_custom_call.1} parent=1 // pred_fallthru
      _
    // Predicated region
    $region14: #{tpu_custom_call.1} parent=1 // pred_check
      _
    $region15: #{tpu_custom_call.1} parent=1 // pred_check_branch
      %38 = sbr.rel (0) target = $region17
    $region16: #{tpu_custom_call.1} parent=1 // pred_region
      %39 = dma.done [#allocation4], 128
    $region17: #{tpu_custom_call.1} parent=1 // pred_fallthru
      _
    // Predicated region
    $region18: #{tpu_custom_call.1} parent=1 // pred_check
      _
    $region19: #{tpu_custom_call.1} parent=1 // pred_check_branch
      %41 = sbr.rel (0) target = $region21
    $region20: #{tpu_custom_call.1} parent=1 // pred_region
      %42 = dma.done [#allocation7], 256
    $region21: #{tpu_custom_call.1} parent=1 // pred_fallthru
      _
    %v44 = vld [vmem:[#allocation3] sm:$0xf]
    %v45 = vld [vmem:[#allocation3 + $0x4] sm:$0xf]
    %v46 = vld [vmem:[#allocation6] sm:$0xf]
    %v47 = vld [vmem:[#allocation6 + $0x4] sm:$0xf]
    %v48 = vld [vmem:[#allocation6 + $0x8] sm:$0xf]
    %v49 = vld [vmem:[#allocation6 + $0xc] sm:$0xf]
    %v52 = vunpack.c.l.b16 %v44
    %v53 = vunpack.c.l.b16 %v45
    %v54 = vpack.c.b16 %v53, %v52
    %v59 = vunpack.c.l.b16 %v46
    %v60 = vunpack.c.l.b16 %v47
    %v61 = vunpack.c.l.b16 %v48
    %v62 = vunpack.c.l.b16 %v49
    %v63 = vpack.c.b16 %v60, %v59
    %v64 = vpack.c.b16 %v62, %v61
    %vm67 = vcmask 261120
    %v69 = vsel %vm67, %v54, 0
    %71 = vmatprep.subr.bf16.mxu0 0
    %72 = vmatpush1.bf16.msra.mxu0 %v63
    %73 = vmatprep.subr.bf16.mxu0 0
    %74 = vmatpush1.bf16.msra.mxu0 %v64
    %75 = vmatprep.subr.bf16.mxu0 0
    %76 = vmatpush1.bf16.msra.mxu0 0
    %77 = vmatprep.subr.bf16.mxu0 0
    %78 = vmatpush1.bf16.msra.mxu0 0
    %79 = vmatprep.subr.bf16.mxu0 0
    %80 = vmatpush1.bf16.msra.mxu0 0
    %81 = vmatprep.subr.bf16.mxu0 0
    %82 = vmatpush1.bf16.msra.mxu0 0
    %83 = vmatprep.subr.bf16.mxu0 0
    %84 = vmatpush1.bf16.msra.mxu0 0
    %85 = vmatprep.subr.bf16.mxu0 0
    %86 = vmatpush1.bf16.msra.mxu0 0
    %87 = vmatprep.subr.bf16.mxu0 0
    %88 = vmatpush1.bf16.msra.mxu0 0
    %89 = vmatprep.subr.bf16.mxu0 0
    %90 = vmatpush1.bf16.msra.mxu0 0
    %91 = vmatprep.subr.bf16.mxu0 0
    %92 = vmatpush1.bf16.msra.mxu0 0
    %93 = vmatprep.subr.bf16.mxu0 0
    %94 = vmatpush1.bf16.msra.mxu0 0
    %95 = vmatprep.subr.bf16.mxu0 0
    %96 = vmatpush1.bf16.msra.mxu0 0
    %97 = vmatprep.subr.bf16.mxu0 0
    %98 = vmatpush1.bf16.msra.mxu0 0
    %99 = vmatprep.subr.bf16.mxu0 0
    %100 = vmatpush1.bf16.msra.mxu0 0
    %101 = vmatprep.subr.bf16.mxu0 0
    %102 = vmatpush1.bf16.msra.mxu0 0
    %103 = vmatprep.mubr.bf16.mxu0 0
    %104 = vmatmul.mubr.bf16.gmra.mrb[0].mxu0 %v69
    %v105 = vpop.f32.mrb[0].mxu0
    %v106 = vadd.f32 0.0, %v105
    %v107 = vpop.f32.mrb[0].mxu0
    %v108 = vpop.f32.mrb[0].mxu0
    %v109 = vadd.f32 0.0, %v108
    %v110 = vpop.f32.mrb[0].mxu0
    %111 = vdwg.mxu0
    %p112 = scmp.eq.s32.totalorder 0, 0
    // Predicated region
    $region22: #{tpu_custom_call.1} parent=1 // pred_check
      %p113 = pneg %p112
    $region23: #{tpu_custom_call.1} parent=1 // pred_check_branch
      %115 = sbr.rel (%p113) target = $region25
    $region24: #{tpu_custom_call.1} parent=1 // pred_region
      %vm116 = vcmask 523264
      %117 = vst.msk [vmem:[#allocation2] sm:$0xff] %vm116, %v106
      %118 = vst.msk [vmem:[#allocation2 + $0x8] sm:$0xff] %vm116, %v109
    $region25: #{tpu_custom_call.1} parent=1 // pred_fallthru
      _
    %p119 = scmp.gt.s32.totalorder 0, 0
    // Predicated region
    $region26: #{tpu_custom_call.1} parent=1 // pred_check
      %p120 = pneg %p119
    $region27: #{tpu_custom_call.1} parent=1 // pred_check_branch
      %122 = sbr.rel (%p120) target = $region29
    $region28: #{tpu_custom_call.1} parent=1 // pred_region
      %v123 = vld [vmem:[#allocation2] sm:$0xff]
      %v124 = vld [vmem:[#allocation2 + $0x8] sm:$0xff]
      %v125 = vadd.f32 %v123, %v106
      %v126 = vadd.f32 %v124, %v109
      %vm127 = vcmask 523264
      %128 = vst.msk [vmem:[#allocation2] sm:$0xff] %vm127, %v125
      %129 = vst.msk [vmem:[#allocation2 + $0x8] sm:$0xff] %vm127, %v126
    $region29: #{tpu_custom_call.1} parent=1 // pred_fallthru
      _
    // Predicated region
    $region30: #{tpu_custom_call.1} parent=1 // pred_check
      %p130 = pneg %p112
    $region31: #{tpu_custom_call.1} parent=1 // pred_check_branch
      %132 = sbr.rel (%p130) target = $region33
    $region32: #{tpu_custom_call.1} parent=1 // pred_region
      %v133 = vld [vmem:[#allocation2] sm:$0xff]
      %v134 = vld [vmem:[#allocation2 + $0x8] sm:$0xff]
      %v135 = vld [vmem:[%s2] sm:$0x1]
      %v137 = vlaneseq
      %v138 = vshrl.u32 %v137, 7
      %v139 = vsub.s32 0, %v138
      %v140 = vrot.slane %v135, %v139
      %v142 = vadd.f32 %v133, %v140
      %v143 = vadd.f32 %v134, %v140
      %vm144 = vcmask 523264
      %145 = vst.msk [vmem:[#allocation8] sm:$0xff] %vm144, %v142
      %146 = vst.msk [vmem:[#allocation8 + $0x8] sm:$0xff] %vm144, %v143
    $region33: #{tpu_custom_call.1} parent=1 // pred_fallthru
      _
    // Predicated region
    $region34: #{tpu_custom_call.1} parent=1 // pred_check
      _
    $region35: #{tpu_custom_call.1} parent=1 // pred_check_branch
      %148 = sbr.rel (0) target = $region37
    $region36: #{tpu_custom_call.1} parent=1 // pred_region
      %s150 = ssub.s32 256, 256
      %151 = vsyncadd [#allocation5], %s150
      %s152 = sshll.u32 [#allocation8], 4
      %s153 = int_to_ptr.vmem [resolvable:$true] %s152
      %158 = dma.vmem_to_hbm [thread:$0]  %s153, 256, %s3, [#allocation5], 128, 128, 8
    $region37: #{tpu_custom_call.1} parent=1 // pred_fallthru
      _
    // Predicated region
    $region38: #{tpu_custom_call.1} parent=1 // pred_check
      _
    $region39: #{tpu_custom_call.1} parent=1 // pred_check_branch
      %160 = sbr.rel (0) target = $region41
    $region40: #{tpu_custom_call.1} parent=1 // pred_region
      %161 = dma.done [#allocation5], 256
    $region41: #{tpu_custom_call.1} parent=1 // pred_fallthru
      _
    %162 = vsyncpa [#allocation4], 1
    %163 = vsyncpa [#allocation7], 1
    %164 = vsyncpa [#allocation5], 1

</llo_original>
